<compile_context>
chip_gen: v7x
topology: tpu7x:2x2x1
jax: 0.10.0
libtpu: 0.0.40
codegen_flags: <defaults>
</compile_context>

<pallas_src>
import functools

import jax
import jax.numpy as jnp
from jax.experimental import pallas as pl
from jax.experimental.pallas import tpu as pltpu


# ---------------------------------------------------------------------------
# Single-step path: whole last slice resident, mean computed once.
# ---------------------------------------------------------------------------
def _pool_lem_single_kernel(x_ref, o_ref, *, inv_s, lane_repeat):
    # x_ref: [1, S, N]  (only the last BK slice is fetched from HBM)
    # o_ref: [R, L]     (lane-dense presentation of the logical [S, N] output)
    mean = jnp.sum(x_ref[0], axis=0, keepdims=True, dtype=jnp.float32) * inv_s  # [1, N]
    if lane_repeat > 1:
        mean = jnp.tile(mean, (1, lane_repeat))                                 # [1, L]
    o_ref[...] = jnp.broadcast_to(mean, o_ref.shape).astype(o_ref.dtype)


# ---------------------------------------------------------------------------
# Large-S*N fallback: tiled reduction over S, then tiled broadcast.
# ---------------------------------------------------------------------------
def _mean_reduce_kernel(x_ref, mean_ref, acc_ref, *,
                        s_total, block_rows, inv_s, needs_mask):
    i = pl.program_id(0)

    @pl.when(i == 0)
    def _():
        acc_ref[...] = jnp.zeros_like(acc_ref)

    xs = x_ref[0]                                                   # [ts, N]
    if needs_mask:
        rows = jax.lax.broadcasted_iota(jnp.int32, xs.shape, 0) + i * block_rows
        xs = jnp.where(rows < s_total, xs, jnp.zeros((), xs.dtype))
    acc_ref[...] += jnp.sum(xs, axis=0, keepdims=True, dtype=jnp.float32)

    @pl.when(i == pl.num_programs(0) - 1)
    def _():
        mean_ref[...] = acc_ref[...] * inv_s


def _broadcast_kernel(mean_ref, o_ref, *, lane_repeat):
    mean = mean_ref[...]                                            # [1, N] f32
    if lane_repeat > 1:
        mean = jnp.tile(mean, (1, lane_repeat))
    o_ref[...] = jnp.broadcast_to(mean, o_ref.shape).astype(o_ref.dtype)


# ---------------------------------------------------------------------------
# Wrapper.
# ---------------------------------------------------------------------------
_SINGLE_STEP_VMEM_BUDGET = 40 * 1024 * 1024   # conservative: fits v7x 64 MiB/TC
_DEFAULT_SCOPED_VMEM = 16 * 1024 * 1024       # v5e default scoped VMEM limit


def _lane_dense_layout(S, N):
    """Output presentation (rows, cols, lane_repeat) for a logical [S, N]."""
    if N < 128 and N % 128 != 0 and 128 % N == 0 and (S * N) % 128 == 0:
        return (S * N) // 128, 128, 128 // N
    return S, N, 1


def pool_lem(x):
    """x: [BK, S, N] -> [S, N]; every row = mean over S of x[-1] (PoolLEM)."""
    BK, S, N = x.shape
    out_dtype = x.dtype
    isz = jnp.dtype(x.dtype).itemsize
    pack = 8 * max(1, 4 // isz)               # sublane packing (8 f32 / 16 bf16 / 32 i8)

    rows, cols, lane_repeat = _lane_dense_layout(S, N)

    # VMEM estimate for the resident-slab path: single-buffered input slab,
    # f32 reduction temporary, double-buffered output slab.
    est_bytes = S * N * isz + S * N * 4 + 2 * rows * cols * isz

    if est_bytes <= _SINGLE_STEP_VMEM_BUDGET:
        compiler_params = pltpu.CompilerParams(
            dimension_semantics=("arbitrary",),
            vmem_limit_bytes=(48 * 1024 * 1024
                              if est_bytes > _DEFAULT_SCOPED_VMEM else None),
        )
        out = pl.pallas_call(
            functools.partial(_pool_lem_single_kernel,
                              inv_s=1.0 / S, lane_repeat=lane_repeat),
            out_shape=jax.ShapeDtypeStruct((rows, cols), out_dtype),
            grid=(1,),
            in_specs=[
                # Only the last BK slice is fetched; constant block index plus
                # single buffering keeps it resident at 1x its size in VMEM.
                pl.BlockSpec((1, S, N), lambda i: (BK - 1, 0, 0),
                             pipeline_mode=pl.Buffered(1)),
            ],
            out_specs=pl.BlockSpec((rows, cols), lambda i: (0, 0)),
            compiler_params=compiler_params,
        )(x)
        return out.reshape(S, N)

    # ---- Fallback: tiled reduction over S (never triggered at demo shapes) ----
    ts = max(pack, min(S, (2 * 1024 * 1024) // max(1, N * isz)))
    ts = max(pack, (ts // pack) * pack)
    n_red = pl.cdiv(S, ts)

    mean = pl.pallas_call(
        functools.partial(_mean_reduce_kernel, s_total=S, block_rows=ts,
                          inv_s=1.0 / S, needs_mask=(S % ts) != 0),
        out_shape=jax.ShapeDtypeStruct((1, N), jnp.float32),
        grid=(n_red,),
        in_specs=[pl.BlockSpec((1, ts, N), lambda i: (BK - 1, i, 0))],
        out_specs=pl.BlockSpec((1, N), lambda i: (0, 0)),
        scratch_shapes=[pltpu.VMEM((1, N), jnp.float32)],
        compiler_params=pltpu.CompilerParams(dimension_semantics=("arbitrary",)),
    )(x)

    # Tiled broadcast of the (lane-dense) output.
    trow = max(pack, min(rows, (4 * 1024 * 1024) // max(1, cols * isz)))
    trow = max(pack, (trow // pack) * pack)
    n_bc = pl.cdiv(rows, trow)

    out = pl.pallas_call(
        functools.partial(_broadcast_kernel, lane_repeat=lane_repeat),
        out_shape=jax.ShapeDtypeStruct((rows, cols), out_dtype),
        grid=(n_bc,),
        in_specs=[pl.BlockSpec((1, N), lambda i: (0, 0),
                               pipeline_mode=pl.Buffered(1))],
        out_specs=pl.BlockSpec((trow, cols), lambda i: (i, 0)),
        compiler_params=pltpu.CompilerParams(dimension_semantics=("arbitrary",)),
    )(mean)
    return out.reshape(S, N)


def pool_lem_ref(x):
    """Plain-JAX reference mirroring the PyTorch forward exactly."""
    BK, S, N = x.shape
    m = jnp.mean(x[-1, :, :], axis=0)                     # [N]
    return jnp.broadcast_to(m[None, :], (S, N))           # [S, N]


if __name__ == "__main__":
    key = jax.random.PRNGKey(0)

    # Docstring-style shape (scaled down): N=64 exercises the lane-dense
    # (S*N/128, 128) output presentation.
    BK, S, N = 12, 16, 64
    x = jax.random.normal(key, (BK, S, N), dtype=jnp.float32)
    out = jax.block_until_ready(pool_lem(x))
    ref = pool_lem_ref(x)
    assert out.shape == (S, N)
    assert jnp.allclose(out, ref, atol=1e-5, rtol=1e-5), "mismatch vs reference"

    # Unaligned shape exercises the generic full-block output path.
    BK2, S2, N2 = 5, 10, 48
    x2 = jax.random.normal(jax.random.PRNGKey(0), (BK2, S2, N2), dtype=jnp.float32)
    out2 = jax.block_until_ready(pool_lem(x2))
    ref2 = pool_lem_ref(x2)
    assert out2.shape == (S2, N2)
    assert jnp.allclose(out2, ref2, atol=1e-5, rtol=1e-5), "mismatch vs reference"

    print("KERNEL_OK")
</pallas_src>

<mosaic_0001>
module attributes {stable_mosaic.version = 11 : i64} {
  func.func @_pool_lem_single_kernel(%arg0: i32, %arg1: memref<1x16x64xf32, #tpu.memory_space<vmem>>, %arg2: memref<8x128xf32, #tpu.memory_space<vmem>>) attributes {dimension_semantics = [#tpu.dimension_semantics<arbitrary>], iteration_bounds = array<i64: 1>, scalar_prefetch = 0 : i64, scratch_operands = 0 : i64, tpu.core_type = #tpu.core_type<tc>, window_params = [{pipeline_mode = #tpu.pipeline_mode<synchronous>, transform_indices = @transform_0, window_bounds = array<i64: 1, 16, 64>}, {pipeline_mode = #tpu.pipeline_mode<synchronous>, transform_indices = @transform_1, window_bounds = array<i64: 8, 128>}]} {
    %c0 = arith.constant 0 : index
    %c0_0 = arith.constant 0 : index
    %c0_1 = arith.constant 0 : index
    %0 = vector.load %arg1[%c0, %c0_0, %c0_1] : memref<1x16x64xf32, #tpu.memory_space<vmem>>, vector<1x16x64xf32>
    %1 = vector.shape_cast %0 : vector<1x16x64xf32> to vector<16x64xf32>
    %cst = arith.constant dense<0.000000e+00> : vector<64xf32>
    %2 = vector.multi_reduction <add>, %1, %cst [0] : vector<16x64xf32> to vector<64xf32>
    %3 = vector.shape_cast %2 : vector<64xf32> to vector<1x64xf32>
    %cst_2 = arith.constant 6.250000e-02 : f32
    %4 = vector.broadcast %cst_2 : f32 to vector<1x64xf32>
    %5 = arith.mulf %3, %4 : vector<1x64xf32>
    %6 = tpu.concatenate %5, %5 in 1 : vector<1x64xf32>, vector<1x64xf32> -> vector<1x128xf32>
    %7 = vector.shape_cast %6 : vector<1x128xf32> to vector<1x128xf32>
    %8 = vector.broadcast %7 : vector<1x128xf32> to vector<8x128xf32>
    %c0_3 = arith.constant 0 : index
    %c0_4 = arith.constant 0 : index
    %9 = vector.load %arg2[%c0_3, %c0_4] : memref<8x128xf32, #tpu.memory_space<vmem>>, vector<8x128xf32>
    tpu.vector_store %arg2[%c0_3, %c0_4], %8 {strides = array<i32>} : memref<8x128xf32, #tpu.memory_space<vmem>>, vector<8x128xf32>,
    return
  }
  func.func @transform_0(%arg0: i32) -> (i32, i32, i32) {
    %c11_i32 = arith.constant 11 : i32
    %c0_i32 = arith.constant 0 : i32
    %c0_i32_0 = arith.constant 0 : i32
    %c0_i32_1 = arith.constant 0 : i32
    return %c11_i32, %c0_i32, %c0_i32_0 : i32, i32, i32
  }
  func.func @transform_1(%arg0: i32) -> (i32, i32) {
    %c0_i32 = arith.constant 0 : i32
    %c0_i32_0 = arith.constant 0 : i32
    %c0_i32_1 = arith.constant 0 : i32
    return %c0_i32, %c0_i32_0 : i32, i32
  }
}

</mosaic_0001>

<llo_original>
// kernel: tpu_custom_call.1
$region0: #{tpu_custom_call.1}
  #allocation0 [shape = 'u32[]', space=smem, size = 0x4, offset = 0x4, fixed_abs, tag = 'smem constant byte address 0x4 - core index']
  #allocation1 [shape = 'u32[144,128]{1,0:T(1,128)}', space=vmem, size = 0x12000, scoped, tag = 'internal scratch']
  %s0 = inlined_call_operand.hbm [shape: f32[12,16,64], index: 0, kind: input, shape index: {}]
  %s1 = inlined_call_operand.hbm [shape: f32[8,128], index: 1, kind: output, shape index: {}]
  %s2 = sld [smem:[#allocation0]]
  $region18: #{tpu_custom_call.1} parent=0
    _
  %s4 = ssub.s32 1, %s2
  %s5 = scalar_select 0, %s4, %s2
  $region1: #{tpu_custom_call.1} parent=0
    #allocation2 [shape = 'u8[8192]{0}', space=vmem, size = 0x2000, scoped, tag = 'input window, operand 0, single buffered']
    #allocation3 [shape = 's32[1]{0}', space=sflag, size = 0x4, scoped, tag = 'scoped memory for tpu_custom_call.1']
    #allocation4 [shape = 's32[1]{0}', space=sflag, size = 0x4, scoped, tag = 'scoped memory for tpu_custom_call.1']
    #allocation5 [shape = 'u8[4096]{0}', space=vmem, size = 0x1000, scoped, tag = 'output window, operand 0, single buffered']
    %6 = vsyncpa [#allocation3], 0
    %7 = vsyncpa [#allocation4], 0
    // Predicated region
    $region2: #{tpu_custom_call.1} parent=1 // pred_check
      _
    $region3: #{tpu_custom_call.1} parent=1 // pred_check_branch
      %9 = sbr.rel (0) target = $region5
    $region4: #{tpu_custom_call.1} parent=1 // pred_region
      %s11 = ssub.s32 256, 256
      %12 = vsyncadd [#allocation3], %s11
      %s13 = scalar_lea.hbm %s0, 2816
      %s14 = sshll.u32 [#allocation2], 4
      %s15 = int_to_ptr.vmem [resolvable:$true] %s14
      %20 = dma.hbm_to_vmem [thread:$0]  %s13, 256, %s15, [#allocation3], 128, 128, 8
    $region5: #{tpu_custom_call.1} parent=1 // pred_fallthru
      _
    // Predicated region
    $region6: #{tpu_custom_call.1} parent=1 // pred_check
      _
    $region7: #{tpu_custom_call.1} parent=1 // pred_check_branch
      %22 = sbr.rel (0) target = $region9
    $region8: #{tpu_custom_call.1} parent=1 // pred_region
      %23 = dma.done [#allocation3], 256
    $region9: #{tpu_custom_call.1} parent=1 // pred_fallthru
      _
    %v24 = vld [vmem:[#allocation2] sm:$0xff]
    %v25 = vld [vmem:[#allocation2 + $0x8] sm:$0xff]
    %vm26 = vcmask 523264
    %v27 = vsel %vm26, %v24, 0.0
    %v28 = vsel %vm26, %v25, 0.0
    %v29 = vadd.f32 %v27, %v28
    %v30 = vrot.slane %v29, 4
    %v31 = vadd.f32 %v29, %v30
    %v32 = vrot.slane %v31, 2
    %v33 = vadd.f32 %v31, %v32
    %v34 = vrot.slane %v33, 1
    %v35 = vadd.f32 %v33, %v34
    %v36 = vmul.f32 %v35, 0.0625
    %38 = vrot.lane.b32.xlu0 %v36, 64
    %v39 = vpop.permute.xlu0 %38
    %v41 = vsel %vm26, %v36, %v39
    %v42 = vlaneseq
    %v43 = vshrl.u32 %v42, 7
    %v44 = vsub.s32 0, %v43
    %v45 = vrot.slane %v41, %v44
    %46 = vst [vmem:[#allocation5] sm:$0xff] %v45
    // Predicated region
    $region10: #{tpu_custom_call.1} parent=1 // pred_check
      _
    $region11: #{tpu_custom_call.1} parent=1 // pred_check_branch
      %48 = sbr.rel (0) target = $region13
    $region12: #{tpu_custom_call.1} parent=1 // pred_region
      %s50 = ssub.s32 128, 128
      %51 = vsyncadd [#allocation4], %s50
      %s53 = sshll.u32 [#allocation5], 4
      %s54 = int_to_ptr.vmem [resolvable:$true] %s53
      %56 = dma.vmem_to_hbm [thread:$0]  %s54, 128, %s1, [#allocation4]
    $region13: #{tpu_custom_call.1} parent=1 // pred_fallthru
      _
    // Predicated region
    $region14: #{tpu_custom_call.1} parent=1 // pred_check
      _
    $region15: #{tpu_custom_call.1} parent=1 // pred_check_branch
      %58 = sbr.rel (0) target = $region17
    $region16: #{tpu_custom_call.1} parent=1 // pred_region
      %59 = dma.done [#allocation4], 128
    $region17: #{tpu_custom_call.1} parent=1 // pred_fallthru
      _
    %60 = vsyncpa [#allocation3], 1
    %61 = vsyncpa [#allocation4], 1

</llo_original>
